<compile_context>
chip_gen: v5e
topology: v5e:2x2
jax: 0.10.0
libtpu: 0.0.40
codegen_flags: <defaults>
</compile_context>

<pallas_src>
import jax
import jax.numpy as jnp
from jax.experimental import pallas as pl
from jax.experimental.pallas import tpu as pltpu


def lst1_kernel(x_ref, w1_ref, b1_ref, w2_ref, b2_ref, wo_ref, bo_ref, out_ref):
    # dense1 + tanh for every (batch, seq) position at once:
    #   h1[b, s*Dh + a] = tanh(sum_d x[b, s, d] * W1[a, d] + b1[a])
    h1 = jnp.tanh(
        jnp.dot(x_ref[...], w1_ref[...], preferred_element_type=jnp.float32)
        + b1_ref[...]
    )  # (B, S*Dh)

    # transposed dense2 + tanh, produced *already flattened* exactly as
    # PyTorch's out.reshape(B, -1) (flat index = c*Dh + a):
    #   h2[b, c*Dh + a] = tanh(sum_s W2[c, s] * h1[b, s*Dh + a] + b2[c])
    h2 = jnp.tanh(
        jnp.dot(h1, w2_ref[...], preferred_element_type=jnp.float32)
        + b2_ref[...]
    )  # (B, D2*Dh)

    # classifier head W_o (single lane-dense MXU dot) + log_softmax over the
    # lane (class) axis.
    logits = (
        jnp.dot(h2, wo_ref[...], preferred_element_type=jnp.float32) + bo_ref[...]
    )  # (B, C)
    m = jnp.max(logits, axis=-1, keepdims=True)
    z = logits - m
    lse = jnp.log(jnp.sum(jnp.exp(z), axis=-1, keepdims=True))
    out_ref[...] = z - lse  # (B, C), lane-dense store


def lst1_forward(x, params):
    W1, b1, W2, b2, Wo, bo = params
    B, S, D = x.shape
    Dh = W1.shape[0]   # input_size (dense1 out)
    D2 = W2.shape[0]   # input_size (dense2 out)
    C = Wo.shape[0]    # num_classes

    # ---- wrapper-side layout plumbing (plain XLA, outside the kernel) ----
    # x flattened per batch element; dense1 becomes a block-diagonal (kron)
    # matmul over the flattened (seq*feature) axis, and the transposed dense2
    # becomes a kron(W2^T, I_Dh) matmul whose output IS the row-major flatten
    # PyTorch feeds to W_o.  At these sizes the padded-with-zeros FLOPs are
    # negligible and every operand is lane-dense.
    xf = x.reshape(B, S * D)                                    # (B, S*D)
    w1big = jnp.kron(jnp.eye(S, dtype=W1.dtype), W1.T)           # (S*D, S*Dh)
    b1big = jnp.tile(b1, S).reshape(1, S * Dh)                   # (1, S*Dh)
    w2big = jnp.kron(W2.T, jnp.eye(Dh, dtype=W2.dtype))          # (S*Dh, D2*Dh)
    b2big = jnp.repeat(b2, Dh).reshape(1, D2 * Dh)               # (1, D2*Dh)
    wot = Wo.T                                                   # (D2*Dh, C)
    bor = bo.reshape(1, C)                                       # (1, C)

    flops = int(
        2 * B * (S * D) * (S * Dh)
        + 2 * B * (S * Dh) * (D2 * Dh)
        + 2 * B * (D2 * Dh) * C
    )
    transcendentals = int(B * (S * Dh) + B * (D2 * Dh) + B * C)
    bytes_accessed = int(
        4 * (xf.size + w1big.size + b1big.size + w2big.size + b2big.size
             + wot.size + bor.size + B * C)
    )

    # Single program, no grid: everything (<1 MiB) sits whole in VMEM.
    out = pl.pallas_call(
        lst1_kernel,
        out_shape=jax.ShapeDtypeStruct((B, C), jnp.float32),
        cost_estimate=pl.CostEstimate(
            flops=flops,
            transcendentals=transcendentals,
            bytes_accessed=bytes_accessed,
        ),
    )(xf, w1big, b1big, w2big, b2big, wot, bor)
    return out  # (B, C)


def reference(x, params):
    """Pure-JAX mirror of the PyTorch forward (eval mode)."""
    W1, b1, W2, b2, Wo, bo = params
    h1 = jnp.tanh(jnp.einsum("bsd,ad->bsa", x, W1) + b1)       # dense1 + tanh
    h1t = jnp.swapaxes(h1, -1, -2)
    h2 = jnp.tanh(jnp.einsum("bas,cs->bac", h1t, W2) + b2)     # dense2 + tanh
    out = jnp.swapaxes(h2, -1, -2)
    flat = out.reshape(x.shape[0], -1)
    logits = flat @ Wo.T + bo
    return jax.nn.log_softmax(logits, axis=1)


if __name__ == "__main__":
    B, S = 2, 8
    input_size = 16            # D (feature dim of x) and the L2DST hidden/output size
    D = input_size
    C = 4                      # num_classes

    key = jax.random.PRNGKey(0)
    ks = jax.random.split(key, 7)
    x = jax.random.normal(ks[0], (B, S, D), jnp.float32)

    # deterministic synthetic parameters (shapes dictated by the module's __init__ / lazy dims)
    W1 = jax.random.uniform(ks[1], (input_size, D), jnp.float32, -0.25, 0.25)   # dense1: in=D, out=input_size
    b1 = jax.random.uniform(ks[2], (input_size,), jnp.float32, -0.25, 0.25)
    W2 = jax.random.uniform(ks[3], (input_size, S), jnp.float32, -0.35, 0.35)   # dense2: in=S, out=input_size
    b2 = jax.random.uniform(ks[4], (input_size,), jnp.float32, -0.35, 0.35)
    xav = (6.0 / (input_size * input_size + C)) ** 0.5
    Wo = jax.random.uniform(ks[5], (C, input_size * input_size), jnp.float32, -xav, xav)
    bo = jax.random.uniform(ks[6], (C,), jnp.float32, -0.05, 0.05)
    params = (W1, b1, W2, b2, Wo, bo)

    out = jax.block_until_ready(lst1_forward(x, params))
    ref = reference(x, params)
    assert out.shape == (B, C), out.shape
    assert jnp.allclose(out, ref, atol=1e-4, rtol=1e-4), (out, ref)
    print("KERNEL_OK")
</pallas_src>

<mosaic_0001>
module attributes {stable_mosaic.version = 11 : i64} {
  func.func @lst1_kernel(%arg0: memref<2x128xf32, #tpu.memory_space<vmem>>, %arg1: memref<128x128xf32, #tpu.memory_space<vmem>>, %arg2: memref<1x128xf32, #tpu.memory_space<vmem>>, %arg3: memref<128x256xf32, #tpu.memory_space<vmem>>, %arg4: memref<1x256xf32, #tpu.memory_space<vmem>>, %arg5: memref<256x4xf32, #tpu.memory_space<vmem>>, %arg6: memref<1x4xf32, #tpu.memory_space<vmem>>, %arg7: memref<2x4xf32, #tpu.memory_space<vmem>>) attributes {dimension_semantics = [], scalar_prefetch = 0 : i64, scratch_operands = 0 : i64, tpu.core_type = #tpu.core_type<tc>} {
    %c0 = arith.constant 0 : index
    %c0_0 = arith.constant 0 : index
    %0 = vector.load %arg0[%c0, %c0_0] : memref<2x128xf32, #tpu.memory_space<vmem>>, vector<2x128xf32>
    %c0_1 = arith.constant 0 : index
    %c0_2 = arith.constant 0 : index
    %1 = vector.load %arg1[%c0_1, %c0_2] : memref<128x128xf32, #tpu.memory_space<vmem>>, vector<128x128xf32>
    %cst = arith.constant dense<0.000000e+00> : vector<2x128xf32>
    %2 = tpu.matmul %0, %1, %cst {dimension_numbers = #tpu.dot_dimension_numbers<[1], [0], [0], [1], [0, 0, 1, 1], [], []>} : vector<2x128xf32>, vector<128x128xf32>, vector<2x128xf32> -> vector<2x128xf32>
    %c0_3 = arith.constant 0 : index
    %c0_4 = arith.constant 0 : index
    %3 = vector.load %arg2[%c0_3, %c0_4] : memref<1x128xf32, #tpu.memory_space<vmem>>, vector<1x128xf32>
    %4 = vector.broadcast %3 : vector<1x128xf32> to vector<2x128xf32>
    %5 = arith.addf %2, %4 : vector<2x128xf32>
    %6 = math.tanh %5 : vector<2x128xf32>
    %c0_5 = arith.constant 0 : index
    %c0_6 = arith.constant 0 : index
    %7 = vector.load %arg3[%c0_5, %c0_6] : memref<128x256xf32, #tpu.memory_space<vmem>>, vector<128x256xf32>
    %cst_7 = arith.constant dense<0.000000e+00> : vector<2x256xf32>
    %8 = tpu.matmul %6, %7, %cst_7 {dimension_numbers = #tpu.dot_dimension_numbers<[1], [0], [0], [1], [0, 0, 1, 1], [], []>} : vector<2x128xf32>, vector<128x256xf32>, vector<2x256xf32> -> vector<2x256xf32>
    %c0_8 = arith.constant 0 : index
    %c0_9 = arith.constant 0 : index
    %9 = vector.load %arg4[%c0_8, %c0_9] : memref<1x256xf32, #tpu.memory_space<vmem>>, vector<1x256xf32>
    %10 = vector.broadcast %9 : vector<1x256xf32> to vector<2x256xf32>
    %11 = arith.addf %8, %10 : vector<2x256xf32>
    %12 = math.tanh %11 : vector<2x256xf32>
    %c0_10 = arith.constant 0 : index
    %c0_11 = arith.constant 0 : index
    %13 = vector.load %arg5[%c0_10, %c0_11] : memref<256x4xf32, #tpu.memory_space<vmem>>, vector<256x4xf32>
    %cst_12 = arith.constant dense<0.000000e+00> : vector<2x4xf32>
    %14 = tpu.matmul %12, %13, %cst_12 {dimension_numbers = #tpu.dot_dimension_numbers<[1], [0], [0], [1], [0, 0, 1, 1], [], []>} : vector<2x256xf32>, vector<256x4xf32>, vector<2x4xf32> -> vector<2x4xf32>
    %c0_13 = arith.constant 0 : index
    %c0_14 = arith.constant 0 : index
    %15 = vector.load %arg6[%c0_13, %c0_14] : memref<1x4xf32, #tpu.memory_space<vmem>>, vector<1x4xf32>
    %16 = vector.broadcast %15 : vector<1x4xf32> to vector<2x4xf32>
    %17 = arith.addf %14, %16 : vector<2x4xf32>
    %cst_15 = arith.constant dense<0xFF800000> : vector<2xf32>
    %18 = vector.multi_reduction <maximumf>, %17, %cst_15 [1] : vector<2x4xf32> to vector<2xf32>
    %19 = vector.shape_cast %18 : vector<2xf32> to vector<2x1xf32>
    %20 = vector.broadcast %19 : vector<2x1xf32> to vector<2x4xf32>
    %21 = arith.subf %17, %20 : vector<2x4xf32>
    %22 = math.exp %21 : vector<2x4xf32>
    %cst_16 = arith.constant dense<0.000000e+00> : vector<2xf32>
    %23 = vector.multi_reduction <add>, %22, %cst_16 [1] : vector<2x4xf32> to vector<2xf32>
    %24 = vector.shape_cast %23 : vector<2xf32> to vector<2x1xf32>
    %25 = math.log %24 : vector<2x1xf32>
    %26 = vector.broadcast %25 : vector<2x1xf32> to vector<2x4xf32>
    %27 = arith.subf %21, %26 : vector<2x4xf32>
    %c0_17 = arith.constant 0 : index
    %c0_18 = arith.constant 0 : index
    %28 = vector.load %arg7[%c0_17, %c0_18] : memref<2x4xf32, #tpu.memory_space<vmem>>, vector<2x4xf32>
    tpu.vector_store %arg7[%c0_17, %c0_18], %27 {strides = array<i32>} : memref<2x4xf32, #tpu.memory_space<vmem>>, vector<2x4xf32>,
    return
  }
}

</mosaic_0001>

<llo_original>
// kernel: tpu_custom_call.1
$region0: #{tpu_custom_call.1}
  #allocation0 [shape = 'u32[]', space=smem, size = 0x4, offset = 0x4, fixed_abs, tag = 'smem constant byte address 0x4 - core index']
  #allocation1 [shape = 'u32[72,128]{1,0:T(1,128)}', space=vmem, size = 0x9000, scoped, tag = 'internal scratch']
  %s0 = inlined_call_operand.vmem [shape: f32[2,128], index: 0, kind: input, shape index: {}]
  %s1 = inlined_call_operand.hbm [shape: f32[128,128], index: 1, kind: input, shape index: {}]
  %s2 = inlined_call_operand.vmem [shape: f32[1,128], index: 2, kind: input, shape index: {}]
  %s3 = inlined_call_operand.vmem [shape: f32[128,256], index: 3, kind: input, shape index: {}]
  %s4 = inlined_call_operand.vmem [shape: f32[1,256], index: 4, kind: input, shape index: {}]
  %s5 = inlined_call_operand.vmem [shape: f32[256,4], index: 5, kind: input, shape index: {}]
  %s6 = inlined_call_operand.vmem [shape: f32[1,4], index: 6, kind: input, shape index: {}]
  %s7 = inlined_call_operand.hbm [shape: f32[2,4], index: 7, kind: output, shape index: {}]
  %s8 = sld [smem:[#allocation0]]
  $region42: #{tpu_custom_call.1} parent=0
    _
  %s10 = ssub.s32 1, %s8
  %s11 = scalar_select 0, %s10, %s8
  $region1: #{tpu_custom_call.1} parent=0
    #allocation2 [shape = 'u8[65536]{0}', space=vmem, size = 0x10000, scoped, tag = 'input window, operand 1, single buffered']
    #allocation3 [shape = 's32[1]{0}', space=sflag, size = 0x4, scoped, tag = 'scoped memory for tpu_custom_call.1']
    #allocation4 [shape = 's32[1]{0}', space=sflag, size = 0x4, scoped, tag = 'scoped memory for tpu_custom_call.1']
    #allocation5 [shape = 'u8[1024]{0}', space=vmem, size = 0x400, scoped, tag = 'output window, operand 0, single buffered']
    %12 = vsyncpa [#allocation3], 0
    %13 = vsyncpa [#allocation4], 0
    // Predicated region
    $region2: #{tpu_custom_call.1} parent=1 // pred_check
      _
    $region3: #{tpu_custom_call.1} parent=1 // pred_check_branch
      %15 = sbr.rel (0) target = $region5
    $region4: #{tpu_custom_call.1} parent=1 // pred_region
      _
    $region5: #{tpu_custom_call.1} parent=1 // pred_fallthru
      _
    // Predicated region
    $region6: #{tpu_custom_call.1} parent=1 // pred_check
      _
    $region7: #{tpu_custom_call.1} parent=1 // pred_check_branch
      %17 = sbr.rel (0) target = $region9
    $region8: #{tpu_custom_call.1} parent=1 // pred_region
      %19 = vsyncadd [#allocation3], 0
      %s20 = sshll.u32 %s1, 4
      %s21 = int_to_ptr.hbm [resolvable:$true] %s20
      %s22 = sshll.u32 [#allocation2], 4
      %s23 = int_to_ptr.vmem [resolvable:$true] %s22
      %28 = dma.hbm_to_vmem [thread:$0]  %s21, 2048, %s23, [#allocation3], 128, 128, 8
    $region9: #{tpu_custom_call.1} parent=1 // pred_fallthru
      _
    // Predicated region
    $region10: #{tpu_custom_call.1} parent=1 // pred_check
      _
    $region11: #{tpu_custom_call.1} parent=1 // pred_check_branch
      %30 = sbr.rel (0) target = $region13
    $region12: #{tpu_custom_call.1} parent=1 // pred_region
      _
    $region13: #{tpu_custom_call.1} parent=1 // pred_fallthru
      _
    // Predicated region
    $region14: #{tpu_custom_call.1} parent=1 // pred_check
      _
    $region15: #{tpu_custom_call.1} parent=1 // pred_check_branch
      %32 = sbr.rel (0) target = $region17
    $region16: #{tpu_custom_call.1} parent=1 // pred_region
      _
    $region17: #{tpu_custom_call.1} parent=1 // pred_fallthru
      _
    // Predicated region
    $region18: #{tpu_custom_call.1} parent=1 // pred_check
      _
    $region19: #{tpu_custom_call.1} parent=1 // pred_check_branch
      %34 = sbr.rel (0) target = $region21
    $region20: #{tpu_custom_call.1} parent=1 // pred_region
      _
    $region21: #{tpu_custom_call.1} parent=1 // pred_fallthru
      _
    // Predicated region
    $region22: #{tpu_custom_call.1} parent=1 // pred_check
      _
    $region23: #{tpu_custom_call.1} parent=1 // pred_check_branch
      %36 = sbr.rel (0) target = $region25
    $region24: #{tpu_custom_call.1} parent=1 // pred_region
      _
    $region25: #{tpu_custom_call.1} parent=1 // pred_fallthru
      _
    // Predicated region
    $region26: #{tpu_custom_call.1} parent=1 // pred_check
      _
    $region27: #{tpu_custom_call.1} parent=1 // pred_check_branch
      %38 = sbr.rel (0) target = $region29
    $region28: #{tpu_custom_call.1} parent=1 // pred_region
      _
    $region29: #{tpu_custom_call.1} parent=1 // pred_fallthru
      _
    // Predicated region
    $region30: #{tpu_custom_call.1} parent=1 // pred_check
      _
    $region31: #{tpu_custom_call.1} parent=1 // pred_check_branch
      %40 = sbr.rel (0) target = $region33
    $region32: #{tpu_custom_call.1} parent=1 // pred_region
      %42 = dma.done [#allocation3], 2048
    $region33: #{tpu_custom_call.1} parent=1 // pred_fallthru
      _
    %v43 = vld [vmem:[%s0] sm:$0x3]
    %v44 = vld [vmem:[#allocation2] sm:$0xff]
    %v45 = vld [vmem:[#allocation2 + $0x8] sm:$0xff]
    %v46 = vld [vmem:[#allocation2 + $0x10] sm:$0xff]
    %v47 = vld [vmem:[#allocation2 + $0x18] sm:$0xff]
    %v48 = vld [vmem:[#allocation2 + $0x20] sm:$0xff]
    %v49 = vld [vmem:[#allocation2 + $0x28] sm:$0xff]
    %v50 = vld [vmem:[#allocation2 + $0x30] sm:$0xff]
    %v51 = vld [vmem:[#allocation2 + $0x38] sm:$0xff]
    %v52 = vld [vmem:[#allocation2 + $0x40] sm:$0xff]
    %v53 = vld [vmem:[#allocation2 + $0x48] sm:$0xff]
    %v54 = vld [vmem:[#allocation2 + $0x50] sm:$0xff]
    %v55 = vld [vmem:[#allocation2 + $0x58] sm:$0xff]
    %v56 = vld [vmem:[#allocation2 + $0x60] sm:$0xff]
    %v57 = vld [vmem:[#allocation2 + $0x68] sm:$0xff]
    %v58 = vld [vmem:[#allocation2 + $0x70] sm:$0xff]
    %v59 = vld [vmem:[#allocation2 + $0x78] sm:$0xff]
    %v60 = vld [vmem:[%s2] sm:$0x1]
    %v62 = vperm.slane %v60, 0
    %64 = vmatpush.msra.mxu0 %v59
    %65 = vmatpush.msra.mxu0 %v58
    %66 = vmatpush.msra.mxu0 %v57
    %67 = vmatpush.msra.mxu0 %v56
    %68 = vmatpush.msra.mxu0 %v55
    %69 = vmatpush.msra.mxu0 %v54
    %70 = vmatpush.msra.mxu0 %v53
    %71 = vmatpush.msra.mxu0 %v52
    %72 = vmatpush.msra.mxu0 %v51
    %73 = vmatpush.msra.mxu0 %v50
    %74 = vmatpush.msra.mxu0 %v49
    %75 = vmatpush.msra.mxu0 %v48
    %76 = vmatpush.msra.mxu0 %v47
    %77 = vmatpush.msra.mxu0 %v46
    %78 = vmatpush.msra.mxu0 %v45
    %79 = vmatpush.msra.mxu0 %v44
    %80 = vmatmul.f32.gmra.mxu0 %v43
    %v81 = vpop.f32.mrf.mxu0
    %v82 = vadd.f32 %v62, %v81
    %83 = vdwg.mxu0
    %v84 = vtanh.pop %v82
    %v85 = vld [vmem:[%s3] sm:$0xff]
    %v86 = vld [vmem:[%s3 + $0x8] sm:$0xff]
    %v87 = vld [vmem:[%s3 + $0x10] sm:$0xff]
    %v88 = vld [vmem:[%s3 + $0x18] sm:$0xff]
    %v89 = vld [vmem:[%s3 + $0x20] sm:$0xff]
    %v90 = vld [vmem:[%s3 + $0x28] sm:$0xff]
    %v91 = vld [vmem:[%s3 + $0x30] sm:$0xff]
    %v92 = vld [vmem:[%s3 + $0x38] sm:$0xff]
    %v93 = vld [vmem:[%s3 + $0x40] sm:$0xff]
    %v94 = vld [vmem:[%s3 + $0x48] sm:$0xff]
    %v95 = vld [vmem:[%s3 + $0x50] sm:$0xff]
    %v96 = vld [vmem:[%s3 + $0x58] sm:$0xff]
    %v97 = vld [vmem:[%s3 + $0x60] sm:$0xff]
    %v98 = vld [vmem:[%s3 + $0x68] sm:$0xff]
    %v99 = vld [vmem:[%s3 + $0x70] sm:$0xff]
    %v100 = vld [vmem:[%s3 + $0x78] sm:$0xff]
    %v101 = vld [vmem:[%s3 + $0x80] sm:$0xff]
    %v102 = vld [vmem:[%s3 + $0x88] sm:$0xff]
    %v103 = vld [vmem:[%s3 + $0x90] sm:$0xff]
    %v104 = vld [vmem:[%s3 + $0x98] sm:$0xff]
    %v105 = vld [vmem:[%s3 + $0xa0] sm:$0xff]
    %v106 = vld [vmem:[%s3 + $0xa8] sm:$0xff]
    %v107 = vld [vmem:[%s3 + $0xb0] sm:$0xff]
    %v108 = vld [vmem:[%s3 + $0xb8] sm:$0xff]
    %v109 = vld [vmem:[%s3 + $0xc0] sm:$0xff]
    %v110 = vld [vmem:[%s3 + $0xc8] sm:$0xff]
    %v111 = vld [vmem:[%s3 + $0xd0] sm:$0xff]
    %v112 = vld [vmem:[%s3 + $0xd8] sm:$0xff]
    %v113 = vld [vmem:[%s3 + $0xe0] sm:$0xff]
    %v114 = vld [vmem:[%s3 + $0xe8] sm:$0xff]
    %v115 = vld [vmem:[%s3 + $0xf0] sm:$0xff]
    %v116 = vld [vmem:[%s3 + $0xf8] sm:$0xff]
    %v117 = vld [vmem:[%s4] sm:$0x3]
    %v119 = vperm.slane %v117, 0
    %v120 = vperm.slane %v117, 1
    %123 = vmatpush.msra.mxu0 %v115
    %124 = vmatpush.msra.mxu0 %v113
    %125 = vmatpush.msra.mxu0 %v111
    %126 = vmatpush.msra.mxu0 %v109
    %127 = vmatpush.msra.mxu0 %v107
    %128 = vmatpush.msra.mxu0 %v105
    %129 = vmatpush.msra.mxu0 %v103
    %130 = vmatpush.msra.mxu0 %v101
    %131 = vmatpush.msra.mxu0 %v99
    %132 = vmatpush.msra.mxu0 %v97
    %133 = vmatpush.msra.mxu0 %v95
    %134 = vmatpush.msra.mxu0 %v93
    %135 = vmatpush.msra.mxu0 %v91
    %136 = vmatpush.msra.mxu0 %v89
    %137 = vmatpush.msra.mxu0 %v87
    %138 = vmatpush.msra.mxu0 %v85
    %139 = vmatmul.f32.gmra.mxu0 %v84
    %v140 = vpop.f32.mrf.mxu0
    %v141 = vadd.f32 %v119, %v140
    %142 = vdwg.mxu0
    %143 = vmatpush.msra.mxu0 %v116
    %144 = vmatpush.msra.mxu0 %v114
    %145 = vmatpush.msra.mxu0 %v112
    %146 = vmatpush.msra.mxu0 %v110
    %147 = vmatpush.msra.mxu0 %v108
    %148 = vmatpush.msra.mxu0 %v106
    %149 = vmatpush.msra.mxu0 %v104
    %150 = vmatpush.msra.mxu0 %v102
    %151 = vmatpush.msra.mxu0 %v100
    %152 = vmatpush.msra.mxu0 %v98
    %153 = vmatpush.msra.mxu0 %v96
    %154 = vmatpush.msra.mxu0 %v94
    %155 = vmatpush.msra.mxu0 %v92
    %156 = vmatpush.msra.mxu0 %v90
    %157 = vmatpush.msra.mxu0 %v88
    %158 = vmatpush.msra.mxu0 %v86
    %159 = vmatmul.f32.gmra.mxu0 %v84
    %v160 = vpop.f32.mrf.mxu0
    %v161 = vadd.f32 %v120, %v160
    %162 = vdwg.mxu0
    %v163 = vtanh.pop %v141
    %v164 = vtanh.pop %v161
    %v165 = vld [vmem:[%s5] sm:$0xff]
    %v166 = vld [vmem:[%s5 + $0x8] sm:$0xff]
    %v167 = vld [vmem:[%s5 + $0x10] sm:$0xff]
    %v168 = vld [vmem:[%s5 + $0x18] sm:$0xff]
    %v169 = vld [vmem:[%s5 + $0x20] sm:$0xff]
    %v170 = vld [vmem:[%s5 + $0x28] sm:$0xff]
    %v171 = vld [vmem:[%s5 + $0x30] sm:$0xff]
    %v172 = vld [vmem:[%s5 + $0x38] sm:$0xff]
    %v173 = vld [vmem:[%s5 + $0x40] sm:$0xff]
    %v174 = vld [vmem:[%s5 + $0x48] sm:$0xff]
    %v175 = vld [vmem:[%s5 + $0x50] sm:$0xff]
    %v176 = vld [vmem:[%s5 + $0x58] sm:$0xff]
    %v177 = vld [vmem:[%s5 + $0x60] sm:$0xff]
    %v178 = vld [vmem:[%s5 + $0x68] sm:$0xff]
    %v179 = vld [vmem:[%s5 + $0x70] sm:$0xff]
    %v180 = vld [vmem:[%s5 + $0x78] sm:$0xff]
    %v181 = vld [vmem:[%s5 + $0x80] sm:$0xff]
    %v182 = vld [vmem:[%s5 + $0x88] sm:$0xff]
    %v183 = vld [vmem:[%s5 + $0x90] sm:$0xff]
    %v184 = vld [vmem:[%s5 + $0x98] sm:$0xff]
    %v185 = vld [vmem:[%s5 + $0xa0] sm:$0xff]
    %v186 = vld [vmem:[%s5 + $0xa8] sm:$0xff]
    %v187 = vld [vmem:[%s5 + $0xb0] sm:$0xff]
    %v188 = vld [vmem:[%s5 + $0xb8] sm:$0xff]
    %v189 = vld [vmem:[%s5 + $0xc0] sm:$0xff]
    %v190 = vld [vmem:[%s5 + $0xc8] sm:$0xff]
    %v191 = vld [vmem:[%s5 + $0xd0] sm:$0xff]
    %v192 = vld [vmem:[%s5 + $0xd8] sm:$0xff]
    %v193 = vld [vmem:[%s5 + $0xe0] sm:$0xff]
    %v194 = vld [vmem:[%s5 + $0xe8] sm:$0xff]
    %v195 = vld [vmem:[%s5 + $0xf0] sm:$0xff]
    %v196 = vld [vmem:[%s5 + $0xf8] sm:$0xff]
    %v197 = vld [vmem:[%s6] sm:$0x1]
    %v199 = vperm.slane %v197, 0
    %201 = vmatpush.msra.mxu0 %v180
    %202 = vmatpush.msra.mxu0 %v179
    %203 = vmatpush.msra.mxu0 %v178
    %204 = vmatpush.msra.mxu0 %v177
    %205 = vmatpush.msra.mxu0 %v176
    %206 = vmatpush.msra.mxu0 %v175
    %207 = vmatpush.msra.mxu0 %v174
    %208 = vmatpush.msra.mxu0 %v173
    %209 = vmatpush.msra.mxu0 %v172
    %210 = vmatpush.msra.mxu0 %v171
    %211 = vmatpush.msra.mxu0 %v170
    %212 = vmatpush.msra.mxu0 %v169
    %213 = vmatpush.msra.mxu0 %v168
    %214 = vmatpush.msra.mxu0 %v167
    %215 = vmatpush.msra.mxu0 %v166
    %216 = vmatpush.msra.mxu0 %v165
    %217 = vmatmul.f32.gmra.mxu0 %v163
    %v218 = vpop.f32.mrf.mxu0
    %v219 = vadd.f32 %v199, %v218
    %220 = vdwg.mxu0
    %221 = vmatpush.msra.mxu0 %v196
    %222 = vmatpush.msra.mxu0 %v195
    %223 = vmatpush.msra.mxu0 %v194
    %224 = vmatpush.msra.mxu0 %v193
    %225 = vmatpush.msra.mxu0 %v192
    %226 = vmatpush.msra.mxu0 %v191
    %227 = vmatpush.msra.mxu0 %v190
    %228 = vmatpush.msra.mxu0 %v189
    %229 = vmatpush.msra.mxu0 %v188
    %230 = vmatpush.msra.mxu0 %v187
    %231 = vmatpush.msra.mxu0 %v186
    %232 = vmatpush.msra.mxu0 %v185
    %233 = vmatpush.msra.mxu0 %v184
    %234 = vmatpush.msra.mxu0 %v183
    %235 = vmatpush.msra.mxu0 %v182
    %236 = vmatpush.msra.mxu0 %v181
    %237 = vmatmul.f32.gmra.mxu0 %v164
    %v238 = vpop.f32.mrf.mxu0
    %v239 = vadd.f32 %v219, %v238
    %240 = vdwg.mxu0
    %vm241 = vcmask 25600
    %v242 = vsel %vm241, %v239, -inf
    %243 = vmax.xlane.f32.xlu0 %v242
    %v244 = vpop.xlane.xlu0 %243
    %v245 = vsub.f32 %v239, %v244
    %v246 = vmul.f32 %v245, 1.442695
    %v247 = vpow.pop %v246
    %v248 = vsel %vm241, %v247, 0.0
    %249 = vadd.xlane.f32.xlu0 %v248
    %v250 = vpop.xlane.xlu0 %249
    %v251 = vlog2.pop %v250
    %v252 = vmul.f32 %v251, 0.6931472
    %v253 = vsub.f32 %v245, %v252
    %254 = vst.msk [vmem:[#allocation5] sm:$0x3] %vm241, %v253
    // Predicated region
    $region34: #{tpu_custom_call.1} parent=1 // pred_check
      _
    $region35: #{tpu_custom_call.1} parent=1 // pred_check_branch
      %256 = sbr.rel (0) target = $region37
    $region36: #{tpu_custom_call.1} parent=1 // pred_region
      %258 = vsyncadd [#allocation4], 0
      %s260 = sshll.u32 [#allocation5], 4
      %s261 = int_to_ptr.vmem [resolvable:$true] %s260
      %s262 = sshll.u32 %s7, 4
      %s263 = int_to_ptr.hbm [resolvable:$true] %s262
      %265 = dma.vmem_to_hbm [thread:$0]  %s261, 32, %s263, [#allocation4]
    $region37: #{tpu_custom_call.1} parent=1 // pred_fallthru
      _
    // Predicated region
    $region38: #{tpu_custom_call.1} parent=1 // pred_check
      _
    $region39: #{tpu_custom_call.1} parent=1 // pred_check_branch
      %267 = sbr.rel (0) target = $region41
    $region40: #{tpu_custom_call.1} parent=1 // pred_region
      %269 = dma.done [#allocation4], 32
    $region41: #{tpu_custom_call.1} parent=1 // pred_fallthru
      _
    %270 = vsyncpa [#allocation3], 1
    %271 = vsyncpa [#allocation4], 1

</llo_original>
